<compile_context>
chip_gen: v7x
topology: tpu7x:2x2x1
jax: 0.10.0
libtpu: 0.0.40
codegen_flags: <defaults>
</compile_context>

<pallas_src>
import functools

import jax
import jax.numpy as jnp
from jax.experimental import pallas as pl
from jax.experimental.pallas import tpu as pltpu


# ----------------------------------------------------------------------------
# Pallas kernels
# ----------------------------------------------------------------------------
def _fused_mlp_kernel(x_ref, w1_ref, b1_ref, w2_ref, b2_ref, o_ref):
    # x: (TB, Fin), w1: (Fin, Fmid), b1: (1, Fmid),
    # w2: (Fmid, Fout), b2: (1, Fout)  ->  o: (TB, Fout)
    # The intermediate activation stays in vregs: no HBM round-trip, no
    # second/third kernel launch.
    h = jnp.dot(x_ref[...], w1_ref[...], preferred_element_type=jnp.float32)
    h = jnp.maximum(h + b1_ref[...], 0.0)          # ReLU fused as epilogue (VPU)
    acc = jnp.dot(h.astype(w2_ref.dtype), w2_ref[...],
                  preferred_element_type=jnp.float32)
    o_ref[...] = (acc + b2_ref[...]).astype(o_ref.dtype)


def _linear_kernel(x_ref, w_ref, b_ref, o_ref, *, apply_relu):
    acc = jnp.dot(x_ref[...], w_ref[...], preferred_element_type=jnp.float32)
    acc = acc + b_ref[...]
    if apply_relu:
        acc = jnp.maximum(acc, 0.0)
    o_ref[...] = acc.astype(o_ref.dtype)


def _relu_kernel(x_ref, o_ref):
    o_ref[...] = jnp.maximum(x_ref[...], 0.0)


def _pick_batch_tile(B):
    # Toy/batch-that-doesn't-tile: one full block. Scaled-up batches get
    # row tiles that keep 8-sublane alignment and enable double-buffering.
    if B <= 512 or B % 8 != 0:
        return B
    for tb in (512, 256, 128, 64, 32, 16, 8):
        if B % tb == 0:
            return tb
    return B


# ----------------------------------------------------------------------------
# Pallas wrappers (jitted so the custom calls are not dispatched eagerly)
# ----------------------------------------------------------------------------
@jax.jit
def fused_linear_relu_linear(x, w1, b1, w2, b2):
    B, Fin = x.shape
    Fmid = w1.shape[1]
    Fout = w2.shape[1]
    TB = _pick_batch_tile(B)
    return pl.pallas_call(
        _fused_mlp_kernel,
        out_shape=jax.ShapeDtypeStruct((B, Fout), x.dtype),
        grid=(pl.cdiv(B, TB),),
        in_specs=[
            pl.BlockSpec((TB, Fin), lambda i: (i, 0)),
            pl.BlockSpec((Fin, Fmid), lambda i: (0, 0)),   # VMEM-resident weight
            pl.BlockSpec((1, Fmid), lambda i: (0, 0)),
            pl.BlockSpec((Fmid, Fout), lambda i: (0, 0)),  # VMEM-resident weight
            pl.BlockSpec((1, Fout), lambda i: (0, 0)),
        ],
        out_specs=pl.BlockSpec((TB, Fout), lambda i: (i, 0)),
        compiler_params=pltpu.CompilerParams(
            dimension_semantics=("parallel",)),
    )(x, w1, b1, w2, b2)


@functools.partial(jax.jit, static_argnames=("apply_relu",))
def pallas_linear(x, w, b, apply_relu=False):
    B, Fin = x.shape
    Fout = w.shape[1]
    TB = _pick_batch_tile(B)
    return pl.pallas_call(
        functools.partial(_linear_kernel, apply_relu=apply_relu),
        out_shape=jax.ShapeDtypeStruct((B, Fout), x.dtype),
        grid=(pl.cdiv(B, TB),),
        in_specs=[
            pl.BlockSpec((TB, Fin), lambda i: (i, 0)),
            pl.BlockSpec((Fin, Fout), lambda i: (0, 0)),
            pl.BlockSpec((1, Fout), lambda i: (0, 0)),
        ],
        out_specs=pl.BlockSpec((TB, Fout), lambda i: (i, 0)),
        compiler_params=pltpu.CompilerParams(
            dimension_semantics=("parallel",)),
    )(x, w, b)


@jax.jit
def pallas_relu(x):
    B, F = x.shape
    TB = _pick_batch_tile(B)
    return pl.pallas_call(
        _relu_kernel,
        out_shape=jax.ShapeDtypeStruct((B, F), x.dtype),
        grid=(pl.cdiv(B, TB),),
        in_specs=[pl.BlockSpec((TB, F), lambda i: (i, 0))],
        out_specs=pl.BlockSpec((TB, F), lambda i: (i, 0)),
        compiler_params=pltpu.CompilerParams(
            dimension_semantics=("parallel",)),
    )(x)


# ----------------------------------------------------------------------------
# Sub-modules (Pallas-backed) and the Connect container
# ----------------------------------------------------------------------------
class PallasLinear:
    def __init__(self, key, fin, fout, name):
        kw, kb = jax.random.split(key)
        scale = 1.0 / jnp.sqrt(jnp.float32(fin))
        self.w = (jax.random.uniform(kw, (fin, fout), jnp.float32,
                                     minval=-1.0, maxval=1.0) * scale)
        # bias stored as (1, Fout): no per-forward reshape
        self.b = (jax.random.uniform(kb, (1, fout), jnp.float32,
                                     minval=-1.0, maxval=1.0) * scale)
        self.name = name
        self._loss = 0.0

    def forward(self, x):
        return pallas_linear(x, self.w, self.b)


class PallasReLU:
    def __init__(self, name):
        self.name = name

    def forward(self, x):
        return pallas_relu(x)


class Connect:
    """Faithful re-implementation of the PyTorch Connect container."""

    def __init__(self, module_list):
        name = ''
        for i in range(len(module_list)):
            if hasattr(module_list[i], 'name'):
                name += module_list[i].name
            if i < len(module_list) - 1:
                name += '-'
        self.name = name
        self.module_list = module_list
        self.training = False  # mirrors self.opt(False) -> eval mode
        self._loss = 0.0

    def _is_fusible_mlp(self):
        ml = self.module_list
        return (len(ml) == 3
                and isinstance(ml[0], PallasLinear)
                and isinstance(ml[1], PallasReLU)
                and isinstance(ml[2], PallasLinear))

    def forward(self, x):
        self._loss = 0
        # Fast path: the whole chain runs as ONE Pallas kernel; the (B, Fmid)
        # intermediate never touches HBM.  Semantics are identical to the
        # sequential loop (sub-module _loss values are 0 / eval mode).
        if self._is_fusible_mlp() and not self.training:
            l1, _, l2 = self.module_list
            return fused_linear_relu_linear(x, l1.w, l1.b, l2.w, l2.b)
        # General sequential fallback (exact PyTorch Connect semantics).
        # TODO(synk): `_loss` accumulation is Python-side state and would not
        # survive jit tracing if training mode produced traced losses.
        for i in range(len(self.module_list)):
            module = self.module_list[i]
            x = module.forward(x)
            if hasattr(module, '_loss') and self.training:
                self._loss += module._loss
        return x


# ----------------------------------------------------------------------------
# Main
# ----------------------------------------------------------------------------
if __name__ == "__main__":
    key = jax.random.PRNGKey(0)
    k_in, k_l1, k_l2 = jax.random.split(key, 3)

    B, H_IN, H_MID, H_OUT = 8, 32, 64, 32
    x = jax.random.normal(k_in, (B, H_IN), jnp.float32)

    model = Connect([
        PallasLinear(k_l1, H_IN, H_MID, name="fc1"),
        PallasReLU(name="relu"),
        PallasLinear(k_l2, H_MID, H_OUT, name="fc2"),
    ])

    out = model.forward(x)
    out = jax.block_until_ready(out)

    # Reference check against plain JAX (same params, same chain).
    ref = x @ model.module_list[0].w + model.module_list[0].b
    ref = jnp.maximum(ref, 0.0)
    ref = ref @ model.module_list[2].w + model.module_list[2].b
    assert out.shape == (B, H_OUT)
    assert jnp.allclose(out, ref, atol=1e-5, rtol=1e-5)

    # Also exercise the generic (non-fused) fallback path for coverage.
    out_fallback = model.module_list[2].forward(
        model.module_list[1].forward(model.module_list[0].forward(x)))
    out_fallback = jax.block_until_ready(out_fallback)
    assert jnp.allclose(out_fallback, ref, atol=1e-5, rtol=1e-5)

    print("KERNEL_OK")
</pallas_src>

<mosaic_0001>
module attributes {stable_mosaic.version = 11 : i64} {
  func.func @_fused_mlp_kernel(%arg0: i32, %arg1: memref<8x32xf32, #tpu.memory_space<vmem>>, %arg2: memref<32x64xf32, #tpu.memory_space<vmem>>, %arg3: memref<1x64xf32, #tpu.memory_space<vmem>>, %arg4: memref<64x32xf32, #tpu.memory_space<vmem>>, %arg5: memref<1x32xf32, #tpu.memory_space<vmem>>, %arg6: memref<8x32xf32, #tpu.memory_space<vmem>>) attributes {dimension_semantics = [#tpu.dimension_semantics<parallel>], iteration_bounds = array<i64: 1>, scalar_prefetch = 0 : i64, scratch_operands = 0 : i64, tpu.core_type = #tpu.core_type<tc>, window_params = [{transform_indices = @transform_0, window_bounds = array<i64: 8, 32>}, {pipeline_mode = #tpu.pipeline_mode<synchronous>, transform_indices = @transform_1, window_bounds = array<i64: 32, 64>}, {pipeline_mode = #tpu.pipeline_mode<synchronous>, transform_indices = @transform_2, window_bounds = array<i64: 1, 64>}, {pipeline_mode = #tpu.pipeline_mode<synchronous>, transform_indices = @transform_3, window_bounds = array<i64: 64, 32>}, {pipeline_mode = #tpu.pipeline_mode<synchronous>, transform_indices = @transform_4, window_bounds = array<i64: 1, 32>}, {transform_indices = @transform_5, window_bounds = array<i64: 8, 32>}]} {
    %c0 = arith.constant 0 : index
    %c0_0 = arith.constant 0 : index
    %0 = vector.load %arg1[%c0, %c0_0] : memref<8x32xf32, #tpu.memory_space<vmem>>, vector<8x32xf32>
    %c0_1 = arith.constant 0 : index
    %c0_2 = arith.constant 0 : index
    %1 = vector.load %arg2[%c0_1, %c0_2] : memref<32x64xf32, #tpu.memory_space<vmem>>, vector<32x64xf32>
    %cst = arith.constant dense<0.000000e+00> : vector<8x64xf32>
    %2 = tpu.matmul %0, %1, %cst {dimension_numbers = #tpu.dot_dimension_numbers<[1], [0], [0], [1], [0, 0, 1, 1], [], []>} : vector<8x32xf32>, vector<32x64xf32>, vector<8x64xf32> -> vector<8x64xf32>
    %c0_3 = arith.constant 0 : index
    %c0_4 = arith.constant 0 : index
    %3 = vector.load %arg3[%c0_3, %c0_4] : memref<1x64xf32, #tpu.memory_space<vmem>>, vector<1x64xf32>
    %4 = vector.broadcast %3 : vector<1x64xf32> to vector<8x64xf32>
    %5 = arith.addf %2, %4 : vector<8x64xf32>
    %cst_5 = arith.constant 0.000000e+00 : f32
    %6 = vector.broadcast %cst_5 : f32 to vector<8x64xf32>
    %7 = arith.maximumf %5, %6 : vector<8x64xf32>
    %c0_6 = arith.constant 0 : index
    %c0_7 = arith.constant 0 : index
    %8 = vector.load %arg4[%c0_6, %c0_7] : memref<64x32xf32, #tpu.memory_space<vmem>>, vector<64x32xf32>
    %cst_8 = arith.constant dense<0.000000e+00> : vector<8x32xf32>
    %9 = tpu.matmul %7, %8, %cst_8 {dimension_numbers = #tpu.dot_dimension_numbers<[1], [0], [0], [1], [0, 0, 1, 1], [], []>} : vector<8x64xf32>, vector<64x32xf32>, vector<8x32xf32> -> vector<8x32xf32>
    %c0_9 = arith.constant 0 : index
    %c0_10 = arith.constant 0 : index
    %10 = vector.load %arg5[%c0_9, %c0_10] : memref<1x32xf32, #tpu.memory_space<vmem>>, vector<1x32xf32>
    %11 = vector.broadcast %10 : vector<1x32xf32> to vector<8x32xf32>
    %12 = arith.addf %9, %11 : vector<8x32xf32>
    %c0_11 = arith.constant 0 : index
    %c0_12 = arith.constant 0 : index
    %13 = vector.load %arg6[%c0_11, %c0_12] : memref<8x32xf32, #tpu.memory_space<vmem>>, vector<8x32xf32>
    tpu.vector_store %arg6[%c0_11, %c0_12], %12 {strides = array<i32>} : memref<8x32xf32, #tpu.memory_space<vmem>>, vector<8x32xf32>,
    return
  }
  func.func @transform_0(%arg0: i32) -> (i32, i32) {
    %c0_i32 = arith.constant 0 : i32
    %c0_i32_0 = arith.constant 0 : i32
    return %arg0, %c0_i32 : i32, i32
  }
  func.func @transform_1(%arg0: i32) -> (i32, i32) {
    %c0_i32 = arith.constant 0 : i32
    %c0_i32_0 = arith.constant 0 : i32
    %c0_i32_1 = arith.constant 0 : i32
    return %c0_i32, %c0_i32_0 : i32, i32
  }
  func.func @transform_2(%arg0: i32) -> (i32, i32) {
    %c0_i32 = arith.constant 0 : i32
    %c0_i32_0 = arith.constant 0 : i32
    %c0_i32_1 = arith.constant 0 : i32
    return %c0_i32, %c0_i32_0 : i32, i32
  }
  func.func @transform_3(%arg0: i32) -> (i32, i32) {
    %c0_i32 = arith.constant 0 : i32
    %c0_i32_0 = arith.constant 0 : i32
    %c0_i32_1 = arith.constant 0 : i32
    return %c0_i32, %c0_i32_0 : i32, i32
  }
  func.func @transform_4(%arg0: i32) -> (i32, i32) {
    %c0_i32 = arith.constant 0 : i32
    %c0_i32_0 = arith.constant 0 : i32
    %c0_i32_1 = arith.constant 0 : i32
    return %c0_i32, %c0_i32_0 : i32, i32
  }
  func.func @transform_5(%arg0: i32) -> (i32, i32) {
    %c0_i32 = arith.constant 0 : i32
    %c0_i32_0 = arith.constant 0 : i32
    return %arg0, %c0_i32 : i32, i32
  }
}

</mosaic_0001>

<llo_original>
// kernel: fused_linear_relu_linear.1
$region0: #{fused_linear_relu_linear.1}
  #allocation0 [shape = 'u32[]', space=smem, size = 0x4, offset = 0x4, fixed_abs, tag = 'smem constant byte address 0x4 - core index']
  #allocation1 [shape = 'u32[144,128]{1,0:T(1,128)}', space=vmem, size = 0x12000, scoped, tag = 'internal scratch']
  %s0 = inlined_call_operand.vmem [shape: f32[8,32], index: 0, kind: input, shape index: {}]
  %s1 = inlined_call_operand.vmem [shape: f32[32,64], index: 1, kind: input, shape index: {}]
  %s2 = inlined_call_operand.vmem [shape: f32[1,64], index: 2, kind: input, shape index: {}]
  %s3 = inlined_call_operand.vmem [shape: f32[64,32], index: 3, kind: input, shape index: {}]
  %s4 = inlined_call_operand.vmem [shape: f32[1,32], index: 4, kind: input, shape index: {}]
  %s5 = inlined_call_operand.hbm [shape: f32[8,32], index: 5, kind: output, shape index: {}]
  %s6 = sld [smem:[#allocation0]]
  $region30: #{fused_linear_relu_linear.1} parent=0
    _
  %s8 = ssub.s32 1, %s6
  %s9 = scalar_select 0, %s8, %s6
  $region1: #{fused_linear_relu_linear.1} parent=0
    #allocation2 [shape = 'u8[4096]{0}', space=vmem, size = 0x1000, scoped, tag = 'output window, operand 0, single buffered']
    #allocation3 [shape = 's32[1]{0}', space=sflag, size = 0x4, scoped, tag = 'scoped memory for fused_linear_relu_linear.1']
    %10 = vsyncpa [#allocation3], 0
    // Predicated region
    $region2: #{fused_linear_relu_linear.1} parent=1 // pred_check
      _
    $region3: #{fused_linear_relu_linear.1} parent=1 // pred_check_branch
      %12 = sbr.rel (0) target = $region5
    $region4: #{fused_linear_relu_linear.1} parent=1 // pred_region
      _
    $region5: #{fused_linear_relu_linear.1} parent=1 // pred_fallthru
      _
    // Predicated region
    $region6: #{fused_linear_relu_linear.1} parent=1 // pred_check
      _
    $region7: #{fused_linear_relu_linear.1} parent=1 // pred_check_branch
      %14 = sbr.rel (0) target = $region9
    $region8: #{fused_linear_relu_linear.1} parent=1 // pred_region
      _
    $region9: #{fused_linear_relu_linear.1} parent=1 // pred_fallthru
      _
    // Predicated region
    $region10: #{fused_linear_relu_linear.1} parent=1 // pred_check
      _
    $region11: #{fused_linear_relu_linear.1} parent=1 // pred_check_branch
      %16 = sbr.rel (0) target = $region13
    $region12: #{fused_linear_relu_linear.1} parent=1 // pred_region
      _
    $region13: #{fused_linear_relu_linear.1} parent=1 // pred_fallthru
      _
    // Predicated region
    $region14: #{fused_linear_relu_linear.1} parent=1 // pred_check
      _
    $region15: #{fused_linear_relu_linear.1} parent=1 // pred_check_branch
      %18 = sbr.rel (0) target = $region17
    $region16: #{fused_linear_relu_linear.1} parent=1 // pred_region
      _
    $region17: #{fused_linear_relu_linear.1} parent=1 // pred_fallthru
      _
    // Predicated region
    $region18: #{fused_linear_relu_linear.1} parent=1 // pred_check
      _
    $region19: #{fused_linear_relu_linear.1} parent=1 // pred_check_branch
      %20 = sbr.rel (0) target = $region21
    $region20: #{fused_linear_relu_linear.1} parent=1 // pred_region
      _
    $region21: #{fused_linear_relu_linear.1} parent=1 // pred_fallthru
      _
    %v21 = vld [vmem:[%s0] sm:$0xff]
    %v22 = vld [vmem:[%s1] sm:$0xff]
    %v23 = vld [vmem:[%s1 + $0x8] sm:$0xff]
    %v24 = vld [vmem:[%s1 + $0x10] sm:$0xff]
    %v25 = vld [vmem:[%s1 + $0x18] sm:$0xff]
    %v26 = vld [vmem:[%s2] sm:$0x1]
    %v28 = vlaneseq
    %v29 = vshrl.u32 %v28, 7
    %v30 = vsub.s32 0, %v29
    %v31 = vrot.slane %v26, %v30
    %vm33 = vcmask 261120
    %v35 = vsel %vm33, %v21, 0
    %37 = vmatprep.subr.mxu0 0.0
    %38 = vmatpush1.msra.mxu0 %v22
    %39 = vmatprep.subr.mxu0 0.0
    %40 = vmatpush1.msra.mxu0 %v23
    %41 = vmatprep.subr.mxu0 0.0
    %42 = vmatpush1.msra.mxu0 %v24
    %43 = vmatprep.subr.mxu0 0.0
    %44 = vmatpush1.msra.mxu0 %v25
    %45 = vmatprep.subr.mxu0 0.0
    %46 = vmatpush1.msra.mxu0 0.0
    %47 = vmatprep.subr.mxu0 0.0
    %48 = vmatpush1.msra.mxu0 0.0
    %49 = vmatprep.subr.mxu0 0.0
    %50 = vmatpush1.msra.mxu0 0.0
    %51 = vmatprep.subr.mxu0 0.0
    %52 = vmatpush1.msra.mxu0 0.0
    %53 = vmatprep.subr.mxu0 0.0
    %54 = vmatpush1.msra.mxu0 0.0
    %55 = vmatprep.subr.mxu0 0.0
    %56 = vmatpush1.msra.mxu0 0.0
    %57 = vmatprep.subr.mxu0 0.0
    %58 = vmatpush1.msra.mxu0 0.0
    %59 = vmatprep.subr.mxu0 0.0
    %60 = vmatpush1.msra.mxu0 0.0
    %61 = vmatprep.subr.mxu0 0.0
    %62 = vmatpush1.msra.mxu0 0.0
    %63 = vmatprep.subr.mxu0 0.0
    %64 = vmatpush1.msra.mxu0 0.0
    %65 = vmatprep.subr.mxu0 0.0
    %66 = vmatpush1.msra.mxu0 0.0
    %67 = vmatprep.subr.mxu0 0.0
    %68 = vmatpush1.msra.mxu0 0.0
    %69 = vmatprep.subr.mxu0 0.0
    %70 = vmatpush1.msra.mxu0 0.0
    %71 = vmatprep.subr.mxu0 0.0
    %72 = vmatpush1.msra.mxu0 0.0
    %73 = vmatprep.subr.mxu0 0.0
    %74 = vmatpush1.msra.mxu0 0.0
    %75 = vmatprep.subr.mxu0 0.0
    %76 = vmatpush1.msra.mxu0 0.0
    %77 = vmatprep.subr.mxu0 0.0
    %78 = vmatpush1.msra.mxu0 0.0
    %79 = vmatprep.subr.mxu0 0.0
    %80 = vmatpush1.msra.mxu0 0.0
    %81 = vmatprep.subr.mxu0 0.0
    %82 = vmatpush1.msra.mxu0 0.0
    %83 = vmatprep.subr.mxu0 0.0
    %84 = vmatpush1.msra.mxu0 0.0
    %85 = vmatprep.subr.mxu0 0.0
    %86 = vmatpush1.msra.mxu0 0.0
    %87 = vmatprep.subr.mxu0 0.0
    %88 = vmatpush1.msra.mxu0 0.0
    %89 = vmatprep.subr.mxu0 0.0
    %90 = vmatpush1.msra.mxu0 0.0
    %91 = vmatprep.subr.mxu0 0.0
    %92 = vmatpush1.msra.mxu0 0.0
    %93 = vmatprep.subr.mxu0 0.0
    %94 = vmatpush1.msra.mxu0 0.0
    %95 = vmatprep.subr.mxu0 0.0
    %96 = vmatpush1.msra.mxu0 0.0
    %97 = vmatprep.subr.mxu0 0.0
    %98 = vmatpush1.msra.mxu0 0.0
    %99 = vmatprep.subr.mxu0 0.0
    %100 = vmatpush1.msra.mxu0 0.0
    %101 = vmatprep.mubr.f32.mxu0 0.0
    %102 = vmatmul.mubr.f32.gmra.mrb[0].mxu0 %v35
    %v103 = vpop.f32.mrb[0].mxu0
    %v104 = vadd.f32 %v31, %v103
    %v105 = vpop.f32.mrb[0].mxu0
    %106 = vdwg.mxu0
    %v107 = vmax.f32 %v104, 0.0
    %v108 = vld [vmem:[%s3] sm:$0xff]
    %v109 = vld [vmem:[%s3 + $0x8] sm:$0xff]
    %v110 = vld [vmem:[%s3 + $0x10] sm:$0xff]
    %v111 = vld [vmem:[%s3 + $0x18] sm:$0xff]
    %v112 = vld [vmem:[%s3 + $0x20] sm:$0xff]
    %v113 = vld [vmem:[%s3 + $0x28] sm:$0xff]
    %v114 = vld [vmem:[%s3 + $0x30] sm:$0xff]
    %v115 = vld [vmem:[%s3 + $0x38] sm:$0xff]
    %v116 = vld [vmem:[%s4] sm:$0x1]
    %v118 = vlaneseq
    %v119 = vshrl.u32 %v118, 7
    %v120 = vsub.s32 0, %v119
    %v121 = vrot.slane %v116, %v120
    %vm123 = vcmask 523264
    %v125 = vsel %vm123, %v107, 0
    %127 = vmatprep.subr.mxu0 0.0
    %128 = vmatpush1.msra.mxu0 %v108
    %129 = vmatprep.subr.mxu0 0.0
    %130 = vmatpush1.msra.mxu0 %v109
    %131 = vmatprep.subr.mxu0 0.0
    %132 = vmatpush1.msra.mxu0 %v110
    %133 = vmatprep.subr.mxu0 0.0
    %134 = vmatpush1.msra.mxu0 %v111
    %135 = vmatprep.subr.mxu0 0.0
    %136 = vmatpush1.msra.mxu0 %v112
    %137 = vmatprep.subr.mxu0 0.0
    %138 = vmatpush1.msra.mxu0 %v113
    %139 = vmatprep.subr.mxu0 0.0
    %140 = vmatpush1.msra.mxu0 %v114
    %141 = vmatprep.subr.mxu0 0.0
    %142 = vmatpush1.msra.mxu0 %v115
    %143 = vmatprep.subr.mxu0 0.0
    %144 = vmatpush1.msra.mxu0 0.0
    %145 = vmatprep.subr.mxu0 0.0
    %146 = vmatpush1.msra.mxu0 0.0
    %147 = vmatprep.subr.mxu0 0.0
    %148 = vmatpush1.msra.mxu0 0.0
    %149 = vmatprep.subr.mxu0 0.0
    %150 = vmatpush1.msra.mxu0 0.0
    %151 = vmatprep.subr.mxu0 0.0
    %152 = vmatpush1.msra.mxu0 0.0
    %153 = vmatprep.subr.mxu0 0.0
    %154 = vmatpush1.msra.mxu0 0.0
    %155 = vmatprep.subr.mxu0 0.0
    %156 = vmatpush1.msra.mxu0 0.0
    %157 = vmatprep.subr.mxu0 0.0
    %158 = vmatpush1.msra.mxu0 0.0
    %159 = vmatprep.subr.mxu0 0.0
    %160 = vmatpush1.msra.mxu0 0.0
    %161 = vmatprep.subr.mxu0 0.0
    %162 = vmatpush1.msra.mxu0 0.0
    %163 = vmatprep.subr.mxu0 0.0
    %164 = vmatpush1.msra.mxu0 0.0
    %165 = vmatprep.subr.mxu0 0.0
    %166 = vmatpush1.msra.mxu0 0.0
    %167 = vmatprep.subr.mxu0 0.0
    %168 = vmatpush1.msra.mxu0 0.0
    %169 = vmatprep.subr.mxu0 0.0
    %170 = vmatpush1.msra.mxu0 0.0
    %171 = vmatprep.subr.mxu0 0.0
    %172 = vmatpush1.msra.mxu0 0.0
    %173 = vmatprep.subr.mxu0 0.0
    %174 = vmatpush1.msra.mxu0 0.0
    %175 = vmatprep.subr.mxu0 0.0
    %176 = vmatpush1.msra.mxu0 0.0
    %177 = vmatprep.subr.mxu0 0.0
    %178 = vmatpush1.msra.mxu0 0.0
    %179 = vmatprep.subr.mxu0 0.0
    %180 = vmatpush1.msra.mxu0 0.0
    %181 = vmatprep.subr.mxu0 0.0
    %182 = vmatpush1.msra.mxu0 0.0
    %183 = vmatprep.subr.mxu0 0.0
    %184 = vmatpush1.msra.mxu0 0.0
    %185 = vmatprep.subr.mxu0 0.0
    %186 = vmatpush1.msra.mxu0 0.0
    %187 = vmatprep.subr.mxu0 0.0
    %188 = vmatpush1.msra.mxu0 0.0
    %189 = vmatprep.subr.mxu0 0.0
    %190 = vmatpush1.msra.mxu0 0.0
    %191 = vmatprep.mubr.f32.mxu0 0.0
    %192 = vmatmul.mubr.f32.gmra.mrb[0].mxu0 %v125
    %v193 = vpop.f32.mrb[0].mxu0
    %v194 = vadd.f32 %v121, %v193
    %v195 = vpop.f32.mrb[0].mxu0
    %196 = vdwg.mxu0
    %197 = vst.msk [vmem:[#allocation2] sm:$0xff] %vm33, %v194
    // Predicated region
    $region22: #{fused_linear_relu_linear.1} parent=1 // pred_check
      _
    $region23: #{fused_linear_relu_linear.1} parent=1 // pred_check_branch
      %199 = sbr.rel (0) target = $region25
    $region24: #{fused_linear_relu_linear.1} parent=1 // pred_region
      %s201 = ssub.s32 128, 128
      %202 = vsyncadd [#allocation3], %s201
      %s204 = sshll.u32 [#allocation2], 4
      %s205 = int_to_ptr.vmem [resolvable:$true] %s204
      %207 = dma.vmem_to_hbm [thread:$0]  %s205, 128, %s5, [#allocation3]
    $region25: #{fused_linear_relu_linear.1} parent=1 // pred_fallthru
      _
    // Predicated region
    $region26: #{fused_linear_relu_linear.1} parent=1 // pred_check
      _
    $region27: #{fused_linear_relu_linear.1} parent=1 // pred_check_branch
      %209 = sbr.rel (0) target = $region29
    $region28: #{fused_linear_relu_linear.1} parent=1 // pred_region
      %210 = dma.done [#allocation3], 128
    $region29: #{fused_linear_relu_linear.1} parent=1 // pred_fallthru
      _
    %211 = vsyncpa [#allocation3], 1

</llo_original>
